<compile_context>
chip_gen: v7x
topology: tpu7x:2x2x1
jax: 0.10.0
libtpu: 0.0.40
codegen_flags: <defaults>
</compile_context>

<pallas_src>
import functools

import jax
import jax.numpy as jnp
from jax.experimental import pallas as pl


LANE = 128


def _pad_to(n, m):
    return ((n + m - 1) // m) * m


# ----------------------------------------------------------------------------
# Fused Pallas kernel: whole DGAPN scoring path in one launch
# ----------------------------------------------------------------------------
def _dgapn_fused_kernel(x_ref, w_ref, b_ref, out_ref, *, meta):
    gnn_meta, enc_meta, head_meta, rnd_meta, gh, eo, ro, lane = meta

    def run_chain(x, layers, full_last=False):
        n = len(layers)
        for idx, (w_off, din, dout, b_row, relu) in enumerate(layers):
            if full_last and idx == n - 1:
                # Use the full 128-lane weight/bias rows (zero-padded) so the dot output is
                # already lane-dense: columns >= dout are exactly zero.
                w = w_ref[w_off:w_off + din, :]
                b = b_ref[b_row:b_row + 1, :]
            else:
                w = w_ref[w_off:w_off + din, :dout]
                b = b_ref[b_row:b_row + 1, :dout]
            x = jnp.dot(x, w, preferred_element_type=jnp.float32) + b
            if relu:
                x = jnp.maximum(x, 0.0)
        return x

    x = x_ref[...]                                   # [N_pad, input_dim] (state rows first)

    # Shared packed GNN over state+candidate rows: cols [0:gh] policy emb, [gh:2gh] RND emb.
    emb = run_chain(x, gnn_meta)
    pol_emb = emb[:, :gh]
    rnd_emb = emb[:, gh:2 * gh]

    # Packed actor/critic encoder, then packed block-diagonal scalar heads -> [N_pad, lane]
    # with column 0 = actor score, column 1 = critic value, remaining lanes exactly zero.
    enc = run_chain(pol_emb, enc_meta)
    head_full = run_chain(enc, head_meta, full_last=True)

    # Packed RND target/predictor: cols [0:ro] = f, [ro:2ro] = g.
    fg = run_chain(rnd_emb, rnd_meta)
    diff = fg[:, :ro] - fg[:, ro:2 * ro]
    rnd = jnp.mean(diff * diff, axis=-1, keepdims=True)              # [N_pad, 1]

    # Lane-dense single store: drop the RND score into column 2 via a lane mask.
    col2 = (jax.lax.broadcasted_iota(jnp.int32, (1, lane), 1) == 2).astype(jnp.float32)
    out_ref[...] = head_full + rnd * col2


def dgapn_fused_scores(w_slab, b_slab, meta, state_x, cand_x):
    """One pallas_call computing actor scores, RND scores and critic values."""
    lane = meta[-1]
    ns, nc = state_x.shape[0], cand_x.shape[0]
    n_all = ns + nc
    n_pad = max(8, _pad_to(n_all, 8))

    x_all = jnp.concatenate([state_x.astype(jnp.float32),
                             cand_x.astype(jnp.float32)], axis=0)
    if n_pad > n_all:
        x_all = jnp.concatenate(
            [x_all, jnp.zeros((n_pad - n_all, x_all.shape[1]), jnp.float32)], axis=0)

    kernel = functools.partial(_dgapn_fused_kernel, meta=meta)
    out = pl.pallas_call(
        kernel,
        out_shape=jax.ShapeDtypeStruct((n_pad, lane), jnp.float32),
    )(x_all, w_slab, b_slab)

    cand_scores = out[ns:n_all, 0]          # actor scores for candidate rows
    values = out[:ns, 1]                    # critic values for state rows
    rnd_scores = out[ns:n_all, 2]           # RND exploration scores for candidate rows
    return cand_scores, rnd_scores, values


# ----------------------------------------------------------------------------
# Parameter construction (deterministic) + slab packing
# ----------------------------------------------------------------------------
def _mlp_params(key, dims, scale=0.1):
    params = []
    for i in range(len(dims) - 1):
        key, k_w, k_b = jax.random.split(key, 3)
        w = scale * jax.random.normal(k_w, (dims[i], dims[i + 1]), jnp.float32)
        b = scale * jax.random.normal(k_b, (1, dims[i + 1]), jnp.float32)
        params.append((w, b))
    return params, key


def init_dgapn_params(key, input_dim, gnn_nb_layers, gnn_nb_hidden,
                      enc_nb_layers, enc_nb_hidden, enc_nb_output,
                      rnd_nb_layers, rnd_nb_hidden, rnd_nb_output):
    params = {}
    gnn_dims = [input_dim] + [gnn_nb_hidden] * gnn_nb_layers
    enc_dims = [gnn_nb_hidden] + [enc_nb_hidden] * enc_nb_layers + [enc_nb_output]
    rnd_dims = [gnn_nb_hidden] + [rnd_nb_hidden] * rnd_nb_layers + [rnd_nb_output]

    params['gnn'], key = _mlp_params(key, gnn_dims)            # policy embedding
    params['actor_enc'], key = _mlp_params(key, enc_dims)      # ActorCriticGAPN actor encoder
    params['actor_head'], key = _mlp_params(key, [enc_nb_output, 1])
    params['critic_enc'], key = _mlp_params(key, enc_dims)     # ActorCriticGAPN critic encoder
    params['critic_head'], key = _mlp_params(key, [enc_nb_output, 1])
    params['rnd_gnn'], key = _mlp_params(key, gnn_dims)        # RNDistillation embedding
    params['rnd_target'], key = _mlp_params(key, rnd_dims)     # fixed target net f
    params['rnd_pred'], key = _mlp_params(key, rnd_dims)       # predictor net g
    return params


def _pack_parallel_mlps(p_f, p_g, share_input=True):
    """Pack two same-shaped MLPs into one chain.  If they share an input, layer 0 is a
    column concat; otherwise (and for all later layers) weights are block-diagonal."""
    packed = []
    for i, ((wf, bf), (wg, bg)) in enumerate(zip(p_f, p_g)):
        if i == 0 and share_input:
            w = jnp.concatenate([wf, wg], axis=1)
        else:
            top = jnp.concatenate(
                [wf, jnp.zeros((wf.shape[0], wg.shape[1]), jnp.float32)], axis=1)
            bot = jnp.concatenate(
                [jnp.zeros((wg.shape[0], wf.shape[1]), jnp.float32), wg], axis=1)
            w = jnp.concatenate([top, bot], axis=0)
        b = jnp.concatenate([bf, bg], axis=1)
        packed.append((w, b))
    return packed


def pack_dgapn_params(raw, lane=LANE):
    """Merge parallel chains and pack everything into two padded f32 slabs + static meta."""
    gnn_packed = _pack_parallel_mlps(raw['gnn'], raw['rnd_gnn'], share_input=True)
    enc_packed = _pack_parallel_mlps(raw['actor_enc'], raw['critic_enc'], share_input=True)
    head_packed = _pack_parallel_mlps(raw['actor_head'], raw['critic_head'], share_input=False)
    rnd_packed = _pack_parallel_mlps(raw['rnd_target'], raw['rnd_pred'], share_input=True)

    chains = [
        (gnn_packed, [True] * len(gnn_packed)),                        # ReLU every layer
        (enc_packed, [True] * len(enc_packed)),                        # ReLU every layer
        (head_packed, [False] * len(head_packed)),                     # linear heads
        (rnd_packed, [True] * (len(rnd_packed) - 1) + [False]),        # no ReLU on last
    ]

    max_dout = max(w.shape[1] for layers, _ in chains for w, _ in layers)
    lane = max(lane, _pad_to(max_dout, lane))

    w_blocks, b_rows, chain_meta = [], [], []
    w_off, b_row = 0, 0
    for layers, relus in chains:
        layer_meta = []
        for (w, b), relu in zip(layers, relus):
            din, dout = int(w.shape[0]), int(w.shape[1])
            din_pad = _pad_to(din, 8)
            w_blocks.append(jnp.zeros((din_pad, lane), jnp.float32).at[:din, :dout].set(w))
            b_rows.append(jnp.zeros((1, lane), jnp.float32).at[:, :dout].set(b))
            layer_meta.append((w_off, din, dout, b_row, bool(relu)))
            w_off += din_pad
            b_row += 1
        chain_meta.append(tuple(layer_meta))

    w_slab = jnp.concatenate(w_blocks, axis=0)
    nb_rows = max(8, _pad_to(b_row, 8))
    if nb_rows > b_row:
        b_rows.append(jnp.zeros((nb_rows - b_row, lane), jnp.float32))
    b_slab = jnp.concatenate(b_rows, axis=0)

    gh = int(raw['gnn'][-1][0].shape[1])          # policy/RND GNN hidden width
    eo = int(raw['actor_head'][0][0].shape[0])    # encoder output width
    ro = int(raw['rnd_target'][-1][0].shape[1])   # RND output width
    meta = (chain_meta[0], chain_meta[1], chain_meta[2], chain_meta[3], gh, eo, ro, lane)
    return w_slab, b_slab, meta


# ----------------------------------------------------------------------------
# DGAPN forward pathways (select_action + get_value + get_inno_reward)
# ----------------------------------------------------------------------------
def dgapn_forward(w_slab, b_slab, state_x, cand_x, batch_idx, *, meta, num_batches):
    cand_scores, inno_scores, values = dgapn_fused_scores(
        w_slab, b_slab, meta, state_x, cand_x)

    # segment softmax over candidates grouped by batch_idx (irregular glue, stays in JAX)
    one_hot = batch_idx[None, :] == jnp.arange(num_batches)[:, None]          # [B, Nc]
    neg_inf = jnp.float32(-1e30)
    masked = jnp.where(one_hot, cand_scores[None, :], neg_inf)                 # [B, Nc]
    m = jnp.max(masked, axis=1, keepdims=True)
    e = jnp.where(one_hot, jnp.exp(masked - m), 0.0)
    denom = jnp.maximum(jnp.sum(e, axis=1, keepdims=True), 1e-30)              # empty-seg guard
    probs = e / denom                                                          # [B, Nc]
    actions = jnp.argmax(masked, axis=1)                                       # greedy action
    logprobs = jnp.log(jnp.take_along_axis(probs, actions[:, None], axis=1))[:, 0]

    return actions, logprobs, values, inno_scores


dgapn_forward_jit = jax.jit(dgapn_forward, static_argnames=("meta", "num_batches"))


# ----------------------------------------------------------------------------
# Pure-JAX reference (for correctness sanity check)
# ----------------------------------------------------------------------------
def _ref_mlp(x, params, relu_last=False):
    n = len(params)
    for i, (w, b) in enumerate(params):
        x = jnp.dot(x, w, precision=jax.lax.Precision.HIGHEST) + b
        if i < n - 1 or relu_last:
            x = jnp.maximum(x, 0.0)
    return x


def dgapn_scores_reference(raw, state_x, cand_x):
    emb_s = _ref_mlp(state_x, raw['gnn'], relu_last=True)
    emb_c = _ref_mlp(cand_x, raw['gnn'], relu_last=True)
    scores = _ref_mlp(_ref_mlp(emb_c, raw['actor_enc'], relu_last=True),
                      raw['actor_head'])[:, 0]
    values = _ref_mlp(_ref_mlp(emb_s, raw['critic_enc'], relu_last=True),
                      raw['critic_head'])[:, 0]
    r = _ref_mlp(cand_x, raw['rnd_gnn'], relu_last=True)
    f = _ref_mlp(r, raw['rnd_target'])
    g = _ref_mlp(r, raw['rnd_pred'])
    rnd = jnp.mean((f - g) ** 2, axis=-1)
    return scores, rnd, values


# ----------------------------------------------------------------------------
if __name__ == "__main__":
    # Small, DGAPN-consistent configuration.
    input_dim = 32
    gnn_nb_layers, gnn_nb_hidden = 2, 32
    enc_nb_layers, enc_nb_hidden, enc_nb_output = 2, 32, 16
    rnd_nb_layers, rnd_nb_hidden, rnd_nb_output = 2, 32, 16

    key = jax.random.PRNGKey(0)
    key, k_params, k_states, k_cands = jax.random.split(key, 4)

    raw_params = init_dgapn_params(
        k_params, input_dim, gnn_nb_layers, gnn_nb_hidden,
        enc_nb_layers, enc_nb_hidden, enc_nb_output,
        rnd_nb_layers, rnd_nb_hidden, rnd_nb_output)
    w_slab, b_slab, meta = pack_dgapn_params(raw_params)

    num_states = 2            # batch of 2 molecular states (aggregated graph features)
    num_cands_per = 4         # 4 candidate graphs per state
    state_x = jax.random.normal(k_states, (num_states, input_dim), jnp.float32)
    cand_x = jax.random.normal(k_cands, (num_states * num_cands_per, input_dim), jnp.float32)
    batch_idx = jnp.repeat(jnp.arange(num_states, dtype=jnp.int32), num_cands_per)

    # Fused-kernel scores vs. pure-JAX reference.
    k_scores, k_rnd, k_values = dgapn_fused_scores(w_slab, b_slab, meta, state_x, cand_x)
    r_scores, r_rnd, r_values = dgapn_scores_reference(raw_params, state_x, cand_x)
    jax.block_until_ready((k_scores, k_rnd, k_values))
    assert float(jnp.max(jnp.abs(k_scores - r_scores))) < 5e-3
    assert float(jnp.max(jnp.abs(k_rnd - r_rnd))) < 5e-3
    assert float(jnp.max(jnp.abs(k_values - r_values))) < 5e-3

    # Full forward (select_action + get_value + get_inno_reward).
    actions, logprobs, values, inno_scores = dgapn_forward_jit(
        w_slab, b_slab, state_x, cand_x, batch_idx, meta=meta, num_batches=num_states)
    jax.block_until_ready((actions, logprobs, values, inno_scores))

    assert actions.shape == (num_states,)
    assert logprobs.shape == (num_states,)
    assert values.shape == (num_states,)
    assert inno_scores.shape == (num_states * num_cands_per,)
    assert bool(jnp.all(jnp.isfinite(logprobs)))
    assert bool(jnp.all(jnp.isfinite(values)))
    assert bool(jnp.all(inno_scores >= 0.0))

    print("KERNEL_OK")
</pallas_src>

<mosaic_0001>
module attributes {stable_mosaic.version = 11 : i64} {
  func.func @_dgapn_fused_kernel(%arg0: memref<16x32xf32, #tpu.memory_space<vmem>>, %arg1: memref<448x128xf32, #tpu.memory_space<vmem>>, %arg2: memref<16x128xf32, #tpu.memory_space<vmem>>, %arg3: memref<16x128xf32, #tpu.memory_space<vmem>>) attributes {dimension_semantics = [], scalar_prefetch = 0 : i64, scratch_operands = 0 : i64, tpu.core_type = #tpu.core_type<tc>} {
    %c0 = arith.constant 0 : index
    %c0_0 = arith.constant 0 : index
    %0 = vector.load %arg0[%c0, %c0_0] : memref<16x32xf32, #tpu.memory_space<vmem>>, vector<16x32xf32>
    %c0_1 = arith.constant 0 : index
    %c0_2 = arith.constant 0 : index
    %1 = vector.load %arg1[%c0_1, %c0_2] : memref<448x128xf32, #tpu.memory_space<vmem>>, vector<32x64xf32>
    %c0_3 = arith.constant 0 : index
    %c0_4 = arith.constant 0 : index
    %2 = vector.load %arg2[%c0_3, %c0_4] : memref<16x128xf32, #tpu.memory_space<vmem>>, vector<1x64xf32>
    %cst = arith.constant dense<0.000000e+00> : vector<16x64xf32>
    %3 = tpu.matmul %0, %1, %cst {dimension_numbers = #tpu.dot_dimension_numbers<[1], [0], [0], [1], [0, 0, 1, 1], [], []>} : vector<16x32xf32>, vector<32x64xf32>, vector<16x64xf32> -> vector<16x64xf32>
    %4 = vector.broadcast %2 : vector<1x64xf32> to vector<16x64xf32>
    %5 = arith.addf %3, %4 : vector<16x64xf32>
    %cst_5 = arith.constant 0.000000e+00 : f32
    %6 = vector.broadcast %cst_5 : f32 to vector<16x64xf32>
    %7 = arith.maximumf %5, %6 : vector<16x64xf32>
    %c32 = arith.constant 32 : index
    %c0_6 = arith.constant 0 : index
    %8 = vector.load %arg1[%c32, %c0_6] : memref<448x128xf32, #tpu.memory_space<vmem>>, vector<64x64xf32>
    %c1 = arith.constant 1 : index
    %c0_7 = arith.constant 0 : index
    %9 = vector.load %arg2[%c1, %c0_7] : memref<16x128xf32, #tpu.memory_space<vmem>>, vector<1x64xf32>
    %cst_8 = arith.constant dense<0.000000e+00> : vector<16x64xf32>
    %10 = tpu.matmul %7, %8, %cst_8 {dimension_numbers = #tpu.dot_dimension_numbers<[1], [0], [0], [1], [0, 0, 1, 1], [], []>} : vector<16x64xf32>, vector<64x64xf32>, vector<16x64xf32> -> vector<16x64xf32>
    %11 = vector.broadcast %9 : vector<1x64xf32> to vector<16x64xf32>
    %12 = arith.addf %10, %11 : vector<16x64xf32>
    %cst_9 = arith.constant 0.000000e+00 : f32
    %13 = vector.broadcast %cst_9 : f32 to vector<16x64xf32>
    %14 = arith.maximumf %12, %13 : vector<16x64xf32>
    %15 = vector.extract_strided_slice %14 {offsets = [0, 0], sizes = [16, 32], strides = [1, 1]} : vector<16x64xf32> to vector<16x32xf32>
    %16 = vector.extract_strided_slice %14 {offsets = [0, 32], sizes = [16, 32], strides = [1, 1]} : vector<16x64xf32> to vector<16x32xf32>
    %c96 = arith.constant 96 : index
    %c0_10 = arith.constant 0 : index
    %17 = vector.load %arg1[%c96, %c0_10] : memref<448x128xf32, #tpu.memory_space<vmem>>, vector<32x64xf32>
    %c2 = arith.constant 2 : index
    %c0_11 = arith.constant 0 : index
    %18 = vector.load %arg2[%c2, %c0_11] : memref<16x128xf32, #tpu.memory_space<vmem>>, vector<1x64xf32>
    %cst_12 = arith.constant dense<0.000000e+00> : vector<16x64xf32>
    %19 = tpu.matmul %15, %17, %cst_12 {dimension_numbers = #tpu.dot_dimension_numbers<[1], [0], [0], [1], [0, 0, 1, 1], [], []>} : vector<16x32xf32>, vector<32x64xf32>, vector<16x64xf32> -> vector<16x64xf32>
    %20 = vector.broadcast %18 : vector<1x64xf32> to vector<16x64xf32>
    %21 = arith.addf %19, %20 : vector<16x64xf32>
    %cst_13 = arith.constant 0.000000e+00 : f32
    %22 = vector.broadcast %cst_13 : f32 to vector<16x64xf32>
    %23 = arith.maximumf %21, %22 : vector<16x64xf32>
    %c128 = arith.constant 128 : index
    %c0_14 = arith.constant 0 : index
    %24 = vector.load %arg1[%c128, %c0_14] : memref<448x128xf32, #tpu.memory_space<vmem>>, vector<64x64xf32>
    %c3 = arith.constant 3 : index
    %c0_15 = arith.constant 0 : index
    %25 = vector.load %arg2[%c3, %c0_15] : memref<16x128xf32, #tpu.memory_space<vmem>>, vector<1x64xf32>
    %cst_16 = arith.constant dense<0.000000e+00> : vector<16x64xf32>
    %26 = tpu.matmul %23, %24, %cst_16 {dimension_numbers = #tpu.dot_dimension_numbers<[1], [0], [0], [1], [0, 0, 1, 1], [], []>} : vector<16x64xf32>, vector<64x64xf32>, vector<16x64xf32> -> vector<16x64xf32>
    %27 = vector.broadcast %25 : vector<1x64xf32> to vector<16x64xf32>
    %28 = arith.addf %26, %27 : vector<16x64xf32>
    %cst_17 = arith.constant 0.000000e+00 : f32
    %29 = vector.broadcast %cst_17 : f32 to vector<16x64xf32>
    %30 = arith.maximumf %28, %29 : vector<16x64xf32>
    %c192 = arith.constant 192 : index
    %c0_18 = arith.constant 0 : index
    %31 = vector.load %arg1[%c192, %c0_18] : memref<448x128xf32, #tpu.memory_space<vmem>>, vector<64x32xf32>
    %c4 = arith.constant 4 : index
    %c0_19 = arith.constant 0 : index
    %32 = vector.load %arg2[%c4, %c0_19] : memref<16x128xf32, #tpu.memory_space<vmem>>, vector<1x32xf32>
    %cst_20 = arith.constant dense<0.000000e+00> : vector<16x32xf32>
    %33 = tpu.matmul %30, %31, %cst_20 {dimension_numbers = #tpu.dot_dimension_numbers<[1], [0], [0], [1], [0, 0, 1, 1], [], []>} : vector<16x64xf32>, vector<64x32xf32>, vector<16x32xf32> -> vector<16x32xf32>
    %34 = vector.broadcast %32 : vector<1x32xf32> to vector<16x32xf32>
    %35 = arith.addf %33, %34 : vector<16x32xf32>
    %cst_21 = arith.constant 0.000000e+00 : f32
    %36 = vector.broadcast %cst_21 : f32 to vector<16x32xf32>
    %37 = arith.maximumf %35, %36 : vector<16x32xf32>
    %c256 = arith.constant 256 : index
    %c0_22 = arith.constant 0 : index
    %38 = vector.load %arg1[%c256, %c0_22] : memref<448x128xf32, #tpu.memory_space<vmem>>, vector<32x128xf32>
    %c5 = arith.constant 5 : index
    %c0_23 = arith.constant 0 : index
    %39 = vector.load %arg2[%c5, %c0_23] : memref<16x128xf32, #tpu.memory_space<vmem>>, vector<1x128xf32>
    %cst_24 = arith.constant dense<0.000000e+00> : vector<16x128xf32>
    %40 = tpu.matmul %37, %38, %cst_24 {dimension_numbers = #tpu.dot_dimension_numbers<[1], [0], [0], [1], [0, 0, 1, 1], [], []>} : vector<16x32xf32>, vector<32x128xf32>, vector<16x128xf32> -> vector<16x128xf32>
    %41 = vector.broadcast %39 : vector<1x128xf32> to vector<16x128xf32>
    %42 = arith.addf %40, %41 : vector<16x128xf32>
    %c288 = arith.constant 288 : index
    %c0_25 = arith.constant 0 : index
    %43 = vector.load %arg1[%c288, %c0_25] : memref<448x128xf32, #tpu.memory_space<vmem>>, vector<32x64xf32>
    %c6 = arith.constant 6 : index
    %c0_26 = arith.constant 0 : index
    %44 = vector.load %arg2[%c6, %c0_26] : memref<16x128xf32, #tpu.memory_space<vmem>>, vector<1x64xf32>
    %cst_27 = arith.constant dense<0.000000e+00> : vector<16x64xf32>
    %45 = tpu.matmul %16, %43, %cst_27 {dimension_numbers = #tpu.dot_dimension_numbers<[1], [0], [0], [1], [0, 0, 1, 1], [], []>} : vector<16x32xf32>, vector<32x64xf32>, vector<16x64xf32> -> vector<16x64xf32>
    %46 = vector.broadcast %44 : vector<1x64xf32> to vector<16x64xf32>
    %47 = arith.addf %45, %46 : vector<16x64xf32>
    %cst_28 = arith.constant 0.000000e+00 : f32
    %48 = vector.broadcast %cst_28 : f32 to vector<16x64xf32>
    %49 = arith.maximumf %47, %48 : vector<16x64xf32>
    %c320 = arith.constant 320 : index
    %c0_29 = arith.constant 0 : index
    %50 = vector.load %arg1[%c320, %c0_29] : memref<448x128xf32, #tpu.memory_space<vmem>>, vector<64x64xf32>
    %c7 = arith.constant 7 : index
    %c0_30 = arith.constant 0 : index
    %51 = vector.load %arg2[%c7, %c0_30] : memref<16x128xf32, #tpu.memory_space<vmem>>, vector<1x64xf32>
    %cst_31 = arith.constant dense<0.000000e+00> : vector<16x64xf32>
    %52 = tpu.matmul %49, %50, %cst_31 {dimension_numbers = #tpu.dot_dimension_numbers<[1], [0], [0], [1], [0, 0, 1, 1], [], []>} : vector<16x64xf32>, vector<64x64xf32>, vector<16x64xf32> -> vector<16x64xf32>
    %53 = vector.broadcast %51 : vector<1x64xf32> to vector<16x64xf32>
    %54 = arith.addf %52, %53 : vector<16x64xf32>
    %cst_32 = arith.constant 0.000000e+00 : f32
    %55 = vector.broadcast %cst_32 : f32 to vector<16x64xf32>
    %56 = arith.maximumf %54, %55 : vector<16x64xf32>
    %c384 = arith.constant 384 : index
    %c0_33 = arith.constant 0 : index
    %57 = vector.load %arg1[%c384, %c0_33] : memref<448x128xf32, #tpu.memory_space<vmem>>, vector<64x32xf32>
    %c8 = arith.constant 8 : index
    %c0_34 = arith.constant 0 : index
    %58 = vector.load %arg2[%c8, %c0_34] : memref<16x128xf32, #tpu.memory_space<vmem>>, vector<1x32xf32>
    %cst_35 = arith.constant dense<0.000000e+00> : vector<16x32xf32>
    %59 = tpu.matmul %56, %57, %cst_35 {dimension_numbers = #tpu.dot_dimension_numbers<[1], [0], [0], [1], [0, 0, 1, 1], [], []>} : vector<16x64xf32>, vector<64x32xf32>, vector<16x32xf32> -> vector<16x32xf32>
    %60 = vector.broadcast %58 : vector<1x32xf32> to vector<16x32xf32>
    %61 = arith.addf %59, %60 : vector<16x32xf32>
    %62 = vector.extract_strided_slice %61 {offsets = [0, 0], sizes = [16, 16], strides = [1, 1]} : vector<16x32xf32> to vector<16x16xf32>
    %63 = vector.extract_strided_slice %61 {offsets = [0, 16], sizes = [16, 16], strides = [1, 1]} : vector<16x32xf32> to vector<16x16xf32>
    %64 = arith.subf %62, %63 : vector<16x16xf32>
    %65 = arith.mulf %64, %64 : vector<16x16xf32>
    %cst_36 = arith.constant dense<0.000000e+00> : vector<16xf32>
    %66 = vector.multi_reduction <add>, %65, %cst_36 [1] : vector<16x16xf32> to vector<16xf32>
    %67 = vector.shape_cast %66 : vector<16xf32> to vector<16x1xf32>
    %cst_37 = arith.constant 1.600000e+01 : f32
    %68 = vector.broadcast %cst_37 : f32 to vector<16x1xf32>
    %69 = arith.divf %67, %68 : vector<16x1xf32>
    %70 = tpu.iota {dimensions = array<i32: 1>} : vector<1x128xi32>
    %c2_i32 = arith.constant 2 : i32
    %71 = vector.broadcast %c2_i32 : i32 to vector<1x128xi32>
    %72 = arith.cmpi eq, %70, %71 : vector<1x128xi32>
    %73 = arith.extui %72 : vector<1x128xi1> to vector<1x128xi32>
    %74 = arith.sitofp %73 : vector<1x128xi32> to vector<1x128xf32>
    %75 = vector.broadcast %69 : vector<16x1xf32> to vector<16x128xf32>
    %76 = vector.broadcast %74 : vector<1x128xf32> to vector<16x128xf32>
    %77 = arith.mulf %75, %76 : vector<16x128xf32>
    %78 = arith.addf %42, %77 : vector<16x128xf32>
    %c0_38 = arith.constant 0 : index
    %c0_39 = arith.constant 0 : index
    %79 = vector.load %arg3[%c0_38, %c0_39] : memref<16x128xf32, #tpu.memory_space<vmem>>, vector<16x128xf32>
    tpu.vector_store %arg3[%c0_38, %c0_39], %78 {strides = array<i32>} : memref<16x128xf32, #tpu.memory_space<vmem>>, vector<16x128xf32>,
    return
  }
}

</mosaic_0001>

<llo_original>
// kernel: tpu_custom_call.1
$region0: #{tpu_custom_call.1}
  #allocation0 [shape = 'u32[]', space=smem, size = 0x4, offset = 0x4, fixed_abs, tag = 'smem constant byte address 0x4 - core index']
  #allocation1 [shape = 'u32[144,128]{1,0:T(1,128)}', space=vmem, size = 0x12000, scoped, tag = 'internal scratch']
  %s0 = inlined_call_operand.hbm [shape: f32[16,32], index: 0, kind: input, shape index: {}]
  %s1 = inlined_call_operand.hbm [shape: f32[448,128], index: 1, kind: input, shape index: {}]
  %s2 = inlined_call_operand.hbm [shape: f32[16,128], index: 2, kind: input, shape index: {}]
  %s3 = inlined_call_operand.hbm [shape: f32[16,128], index: 3, kind: output, shape index: {}]
  %s4 = sld [smem:[#allocation0]]
  $region34: #{tpu_custom_call.1} parent=0
    _
  %s6 = ssub.s32 1, %s4
  %s7 = scalar_select 0, %s6, %s4
  $region1: #{tpu_custom_call.1} parent=0
    #allocation2 [shape = 'u8[8192]{0}', space=vmem, size = 0x2000, scoped, tag = 'input window, operand 0, single buffered']
    #allocation3 [shape = 's32[1]{0}', space=sflag, size = 0x4, scoped, tag = 'scoped memory for tpu_custom_call.1']
    #allocation4 [shape = 's32[1]{0}', space=sflag, size = 0x4, scoped, tag = 'scoped memory for tpu_custom_call.1']
    #allocation5 [shape = 'u8[229376]{0}', space=vmem, size = 0x38000, scoped, tag = 'input window, operand 1, single buffered']
    #allocation6 [shape = 's32[1]{0}', space=sflag, size = 0x4, scoped, tag = 'scoped memory for tpu_custom_call.1']
    #allocation7 [shape = 'u8[8192]{0}', space=vmem, size = 0x2000, scoped, tag = 'input window, operand 2, single buffered']
    #allocation8 [shape = 'u8[8192]{0}', space=vmem, size = 0x2000, scoped, tag = 'output window, operand 0, single buffered']
    %8 = vsyncpa [#allocation3], 0
    %9 = vsyncpa [#allocation6], 0
    %10 = vsyncpa [#allocation4], 0
    // Predicated region
    $region2: #{tpu_custom_call.1} parent=1 // pred_check
      _
    $region3: #{tpu_custom_call.1} parent=1 // pred_check_branch
      %12 = sbr.rel (0) target = $region5
    $region4: #{tpu_custom_call.1} parent=1 // pred_region
      %s14 = ssub.s32 256, 256
      %15 = vsyncadd [#allocation3], %s14
      %s16 = sshll.u32 [#allocation2], 4
      %s17 = int_to_ptr.vmem [resolvable:$true] %s16
      %22 = dma.hbm_to_vmem [thread:$0]  %s0, 256, %s17, [#allocation3], 128, 128, 8
    $region5: #{tpu_custom_call.1} parent=1 // pred_fallthru
      _
    // Predicated region
    $region6: #{tpu_custom_call.1} parent=1 // pred_check
      _
    $region7: #{tpu_custom_call.1} parent=1 // pred_check_branch
      %24 = sbr.rel (0) target = $region9
    $region8: #{tpu_custom_call.1} parent=1 // pred_region
      %s26 = ssub.s32 7168, 7168
      %27 = vsyncadd [#allocation6], %s26
      %s28 = sshll.u32 [#allocation5], 4
      %s29 = int_to_ptr.vmem [resolvable:$true] %s28
      %34 = dma.hbm_to_vmem [thread:$0]  %s1, 7168, %s29, [#allocation6], 128, 128, 8
    $region9: #{tpu_custom_call.1} parent=1 // pred_fallthru
      _
    // Predicated region
    $region10: #{tpu_custom_call.1} parent=1 // pred_check
      _
    $region11: #{tpu_custom_call.1} parent=1 // pred_check_branch
      %36 = sbr.rel (0) target = $region13
    $region12: #{tpu_custom_call.1} parent=1 // pred_region
      %s38 = ssub.s32 256, 256
      %39 = vsyncadd [#allocation6], %s38
      %s40 = sshll.u32 [#allocation7], 4
      %s41 = int_to_ptr.vmem [resolvable:$true] %s40
      %46 = dma.hbm_to_vmem [thread:$0]  %s2, 256, %s41, [#allocation6], 128, 128, 8
    $region13: #{tpu_custom_call.1} parent=1 // pred_fallthru
      _
    // Predicated region
    $region14: #{tpu_custom_call.1} parent=1 // pred_check
      _
    $region15: #{tpu_custom_call.1} parent=1 // pred_check_branch
      %48 = sbr.rel (0) target = $region17
    $region16: #{tpu_custom_call.1} parent=1 // pred_region
      %49 = dma.done [#allocation3], 256
    $region17: #{tpu_custom_call.1} parent=1 // pred_fallthru
      _
    // Predicated region
    $region18: #{tpu_custom_call.1} parent=1 // pred_check
      _
    $region19: #{tpu_custom_call.1} parent=1 // pred_check_branch
      %51 = sbr.rel (0) target = $region21
    $region20: #{tpu_custom_call.1} parent=1 // pred_region
      %52 = dma.done [#allocation6], 7168
    $region21: #{tpu_custom_call.1} parent=1 // pred_fallthru
      _
    // Predicated region
    $region22: #{tpu_custom_call.1} parent=1 // pred_check
      _
    $region23: #{tpu_custom_call.1} parent=1 // pred_check_branch
      %54 = sbr.rel (0) target = $region25
    $region24: #{tpu_custom_call.1} parent=1 // pred_region
      %55 = dma.done [#allocation6], 256
    $region25: #{tpu_custom_call.1} parent=1 // pred_fallthru
      _
    %v56 = vld [vmem:[#allocation2] sm:$0xff]
    %v57 = vld [vmem:[#allocation2 + $0x8] sm:$0xff]
    %v58 = vld [vmem:[#allocation5] sm:$0xff]
    %v59 = vld [vmem:[#allocation5 + $0x8] sm:$0xff]
    %v60 = vld [vmem:[#allocation5 + $0x10] sm:$0xff]
    %v61 = vld [vmem:[#allocation5 + $0x18] sm:$0xff]
    %v62 = vld [vmem:[#allocation7] sm:$0x1]
    %v63 = vlaneseq
    %v64 = vshrl.u32 %v63, 7
    %v65 = vsub.s32 0, %v64
    %v66 = vrot.slane %v62, %v65
    %vm67 = vcmask 261120
    %v69 = vsel %vm67, %v56, 0
    %v72 = vsel %vm67, %v57, 0
    %74 = vmatprep.subr.mxu0 0.0
    %75 = vmatpush1.msra.mxu0 %v58
    %76 = vmatprep.subr.mxu0 0.0
    %77 = vmatpush1.msra.mxu0 %v59
    %78 = vmatprep.subr.mxu0 0.0
    %79 = vmatpush1.msra.mxu0 %v60
    %80 = vmatprep.subr.mxu0 0.0
    %81 = vmatpush1.msra.mxu0 %v61
    %82 = vmatprep.subr.mxu0 0.0
    %83 = vmatpush1.msra.mxu0 0.0
    %84 = vmatprep.subr.mxu0 0.0
    %85 = vmatpush1.msra.mxu0 0.0
    %86 = vmatprep.subr.mxu0 0.0
    %87 = vmatpush1.msra.mxu0 0.0
    %88 = vmatprep.subr.mxu0 0.0
    %89 = vmatpush1.msra.mxu0 0.0
    %90 = vmatprep.subr.mxu0 0.0
    %91 = vmatpush1.msra.mxu0 0.0
    %92 = vmatprep.subr.mxu0 0.0
    %93 = vmatpush1.msra.mxu0 0.0
    %94 = vmatprep.subr.mxu0 0.0
    %95 = vmatpush1.msra.mxu0 0.0
    %96 = vmatprep.subr.mxu0 0.0
    %97 = vmatpush1.msra.mxu0 0.0
    %98 = vmatprep.subr.mxu0 0.0
    %99 = vmatpush1.msra.mxu0 0.0
    %100 = vmatprep.subr.mxu0 0.0
    %101 = vmatpush1.msra.mxu0 0.0
    %102 = vmatprep.subr.mxu0 0.0
    %103 = vmatpush1.msra.mxu0 0.0
    %104 = vmatprep.subr.mxu0 0.0
    %105 = vmatpush1.msra.mxu0 0.0
    %106 = vmatprep.subr.mxu0 0.0
    %107 = vmatpush1.msra.mxu0 0.0
    %108 = vmatprep.subr.mxu0 0.0
    %109 = vmatpush1.msra.mxu0 0.0
    %110 = vmatprep.subr.mxu0 0.0
    %111 = vmatpush1.msra.mxu0 0.0
    %112 = vmatprep.subr.mxu0 0.0
    %113 = vmatpush1.msra.mxu0 0.0
    %114 = vmatprep.subr.mxu0 0.0
    %115 = vmatpush1.msra.mxu0 0.0
    %116 = vmatprep.subr.mxu0 0.0
    %117 = vmatpush1.msra.mxu0 0.0
    %118 = vmatprep.subr.mxu0 0.0
    %119 = vmatpush1.msra.mxu0 0.0
    %120 = vmatprep.subr.mxu0 0.0
    %121 = vmatpush1.msra.mxu0 0.0
    %122 = vmatprep.subr.mxu0 0.0
    %123 = vmatpush1.msra.mxu0 0.0
    %124 = vmatprep.subr.mxu0 0.0
    %125 = vmatpush1.msra.mxu0 0.0
    %126 = vmatprep.subr.mxu0 0.0
    %127 = vmatpush1.msra.mxu0 0.0
    %128 = vmatprep.subr.mxu0 0.0
    %129 = vmatpush1.msra.mxu0 0.0
    %130 = vmatprep.subr.mxu0 0.0
    %131 = vmatpush1.msra.mxu0 0.0
    %132 = vmatprep.subr.mxu0 0.0
    %133 = vmatpush1.msra.mxu0 0.0
    %134 = vmatprep.subr.mxu0 0.0
    %135 = vmatpush1.msra.mxu0 0.0
    %136 = vmatprep.subr.mxu0 0.0
    %137 = vmatpush1.msra.mxu0 0.0
    %138 = vmatprep.mubr.f32.mxu0 0.0
    %139 = vmatmul.mubr.f32.gmra.mrb[0].mxu0 %v69
    %v140 = vpop.f32.mrb[0].mxu0
    %v141 = vadd.f32 %v66, %v140
    %v142 = vpop.f32.mrb[0].mxu0
    %143 = vmatprep.mubr.f32.mxu0 0.0
    %144 = vmatmul.mubr.f32.gmra.mrb[0].mxu0 %v72
    %v145 = vpop.f32.mrb[0].mxu0
    %v146 = vadd.f32 %v66, %v145
    %v147 = vpop.f32.mrb[0].mxu0
    %148 = vdwg.mxu0
    %v149 = vmax.f32 %v141, 0.0
    %v150 = vmax.f32 %v146, 0.0
    %v151 = vld [vmem:[#allocation5 + $0x20] sm:$0xff]
    %v152 = vld [vmem:[#allocation5 + $0x28] sm:$0xff]
    %v153 = vld [vmem:[#allocation5 + $0x30] sm:$0xff]
    %v154 = vld [vmem:[#allocation5 + $0x38] sm:$0xff]
    %v155 = vld [vmem:[#allocation5 + $0x40] sm:$0xff]
    %v156 = vld [vmem:[#allocation5 + $0x48] sm:$0xff]
    %v157 = vld [vmem:[#allocation5 + $0x50] sm:$0xff]
    %v158 = vld [vmem:[#allocation5 + $0x58] sm:$0xff]
    %v159 = vld [vmem:[#allocation7 + $0x1] sm:$0x1]
    %v160 = vlaneseq
    %v161 = vshrl.u32 %v160, 7
    %v162 = vsub.s32 0, %v161
    %v163 = vrot.slane %v159, %v162
    %vm164 = vcmask 523264
    %v166 = vsel %vm164, %v149, 0
    %v169 = vsel %vm164, %v150, 0
    %171 = vmatprep.subr.mxu0 0.0
    %172 = vmatpush1.msra.mxu0 %v151
    %173 = vmatprep.subr.mxu0 0.0
    %174 = vmatpush1.msra.mxu0 %v152
    %175 = vmatprep.subr.mxu0 0.0
    %176 = vmatpush1.msra.mxu0 %v153
    %177 = vmatprep.subr.mxu0 0.0
    %178 = vmatpush1.msra.mxu0 %v154
    %179 = vmatprep.subr.mxu0 0.0
    %180 = vmatpush1.msra.mxu0 %v155
    %181 = vmatprep.subr.mxu0 0.0
    %182 = vmatpush1.msra.mxu0 %v156
    %183 = vmatprep.subr.mxu0 0.0
    %184 = vmatpush1.msra.mxu0 %v157
    %185 = vmatprep.subr.mxu0 0.0
    %186 = vmatpush1.msra.mxu0 %v158
    %187 = vmatprep.subr.mxu0 0.0
    %188 = vmatpush1.msra.mxu0 0.0
    %189 = vmatprep.subr.mxu0 0.0
    %190 = vmatpush1.msra.mxu0 0.0
    %191 = vmatprep.subr.mxu0 0.0
    %192 = vmatpush1.msra.mxu0 0.0
    %193 = vmatprep.subr.mxu0 0.0
    %194 = vmatpush1.msra.mxu0 0.0
    %195 = vmatprep.subr.mxu0 0.0
    %196 = vmatpush1.msra.mxu0 0.0
    %197 = vmatprep.subr.mxu0 0.0
    %198 = vmatpush1.msra.mxu0 0.0
    %199 = vmatprep.subr.mxu0 0.0
    %200 = vmatpush1.msra.mxu0 0.0
    %201 = vmatprep.subr.mxu0 0.0
    %202 = vmatpush1.msra.mxu0 0.0
    %203 = vmatprep.subr.mxu0 0.0
    %204 = vmatpush1.msra.mxu0 0.0
    %205 = vmatprep.subr.mxu0 0.0
    %206 = vmatpush1.msra.mxu0 0.0
    %207 = vmatprep.subr.mxu0 0.0
    %208 = vmatpush1.msra.mxu0 0.0
    %209 = vmatprep.subr.mxu0 0.0
    %210 = vmatpush1.msra.mxu0 0.0
    %211 = vmatprep.subr.mxu0 0.0
    %212 = vmatpush1.msra.mxu0 0.0
    %213 = vmatprep.subr.mxu0 0.0
    %214 = vmatpush1.msra.mxu0 0.0
    %215 = vmatprep.subr.mxu0 0.0
    %216 = vmatpush1.msra.mxu0 0.0
    %217 = vmatprep.subr.mxu0 0.0
    %218 = vmatpush1.msra.mxu0 0.0
    %219 = vmatprep.subr.mxu0 0.0
    %220 = vmatpush1.msra.mxu0 0.0
    %221 = vmatprep.subr.mxu0 0.0
    %222 = vmatpush1.msra.mxu0 0.0
    %223 = vmatprep.subr.mxu0 0.0
    %224 = vmatpush1.msra.mxu0 0.0
    %225 = vmatprep.subr.mxu0 0.0
    %226 = vmatpush1.msra.mxu0 0.0
    %227 = vmatprep.subr.mxu0 0.0
    %228 = vmatpush1.msra.mxu0 0.0
    %229 = vmatprep.subr.mxu0 0.0
    %230 = vmatpush1.msra.mxu0 0.0
    %231 = vmatprep.subr.mxu0 0.0
    %232 = vmatpush1.msra.mxu0 0.0
    %233 = vmatprep.subr.mxu0 0.0
    %234 = vmatpush1.msra.mxu0 0.0
    %235 = vmatprep.mubr.f32.mxu0 0.0
    %236 = vmatmul.mubr.f32.gmra.mrb[0].mxu0 %v166
    %v237 = vpop.f32.mrb[0].mxu0
    %v238 = vadd.f32 %v163, %v237
    %v239 = vpop.f32.mrb[0].mxu0
    %240 = vmatprep.mubr.f32.mxu0 0.0
    %241 = vmatmul.mubr.f32.gmra.mrb[0].mxu0 %v169
    %v242 = vpop.f32.mrb[0].mxu0
    %v243 = vadd.f32 %v163, %v242
    %v244 = vpop.f32.mrb[0].mxu0
    %245 = vdwg.mxu0
    %v246 = vmax.f32 %v238, 0.0
    %v247 = vmax.f32 %v243, 0.0
    %v248 = vld [vmem:[#allocation5 + $0x60] sm:$0xff]
    %v249 = vld [vmem:[#allocation5 + $0x68] sm:$0xff]
    %v250 = vld [vmem:[#allocation5 + $0x70] sm:$0xff]
    %v251 = vld [vmem:[#allocation5 + $0x78] sm:$0xff]
    %v252 = vld [vmem:[#allocation7 + $0x2] sm:$0x1]
    %v253 = vlaneseq
    %v254 = vshrl.u32 %v253, 7
    %v255 = vsub.s32 0, %v254
    %v256 = vrot.slane %v252, %v255
    %v258 = vsel %vm67, %v246, 0
    %v261 = vsel %vm67, %v247, 0
    %263 = vmatprep.subr.mxu0 0.0
    %264 = vmatpush1.msra.mxu0 %v248
    %265 = vmatprep.subr.mxu0 0.0
    %266 = vmatpush1.msra.mxu0 %v249
    %267 = vmatprep.subr.mxu0 0.0
    %268 = vmatpush1.msra.mxu0 %v250
    %269 = vmatprep.subr.mxu0 0.0
    %270 = vmatpush1.msra.mxu0 %v251
    %271 = vmatprep.subr.mxu0 0.0
    %272 = vmatpush1.msra.mxu0 0.0
    %273 = vmatprep.subr.mxu0 0.0
    %274 = vmatpush1.msra.mxu0 0.0
    %275 = vmatprep.subr.mxu0 0.0
    %276 = vmatpush1.msra.mxu0 0.0
    %277 = vmatprep.subr.mxu0 0.0
    %278 = vmatpush1.msra.mxu0 0.0
    %279 = vmatprep.subr.mxu0 0.0
    %280 = vmatpush1.msra.mxu0 0.0
    %281 = vmatprep.subr.mxu0 0.0
    %282 = vmatpush1.msra.mxu0 0.0
    %283 = vmatprep.subr.mxu0 0.0
    %284 = vmatpush1.msra.mxu0 0.0
    %285 = vmatprep.subr.mxu0 0.0
    %286 = vmatpush1.msra.mxu0 0.0
    %287 = vmatprep.subr.mxu0 0.0
    %288 = vmatpush1.msra.mxu0 0.0
    %289 = vmatprep.subr.mxu0 0.0
    %290 = vmatpush1.msra.mxu0 0.0
    %291 = vmatprep.subr.mxu0 0.0
    %292 = vmatpush1.msra.mxu0 0.0
    %293 = vmatprep.subr.mxu0 0.0
    %294 = vmatpush1.msra.mxu0 0.0
    %295 = vmatprep.subr.mxu0 0.0
    %296 = vmatpush1.msra.mxu0 0.0
    %297 = vmatprep.subr.mxu0 0.0
    %298 = vmatpush1.msra.mxu0 0.0
    %299 = vmatprep.subr.mxu0 0.0
    %300 = vmatpush1.msra.mxu0 0.0
    %301 = vmatprep.subr.mxu0 0.0
    %302 = vmatpush1.msra.mxu0 0.0
    %303 = vmatprep.subr.mxu0 0.0
    %304 = vmatpush1.msra.mxu0 0.0
    %305 = vmatprep.subr.mxu0 0.0
    %306 = vmatpush1.msra.mxu0 0.0
    %307 = vmatprep.subr.mxu0 0.0
    %308 = vmatpush1.msra.mxu0 0.0
    %309 = vmatprep.subr.mxu0 0.0
    %310 = vmatpush1.msra.mxu0 0.0
    %311 = vmatprep.subr.mxu0 0.0
    %312 = vmatpush1.msra.mxu0 0.0
    %313 = vmatprep.subr.mxu0 0.0
    %314 = vmatpush1.msra.mxu0 0.0
    %315 = vmatprep.subr.mxu0 0.0
    %316 = vmatpush1.msra.mxu0 0.0
    %317 = vmatprep.subr.mxu0 0.0
    %318 = vmatpush1.msra.mxu0 0.0
    %319 = vmatprep.subr.mxu0 0.0
    %320 = vmatpush1.msra.mxu0 0.0
    %321 = vmatprep.subr.mxu0 0.0
    %322 = vmatpush1.msra.mxu0 0.0
    %323 = vmatprep.subr.mxu0 0.0
    %324 = vmatpush1.msra.mxu0 0.0
    %325 = vmatprep.subr.mxu0 0.0
    %326 = vmatpush1.msra.mxu0 0.0
    %327 = vmatprep.mubr.f32.mxu0 0.0
    %328 = vmatmul.mubr.f32.gmra.mrb[0].mxu0 %v258
    %v329 = vpop.f32.mrb[0].mxu0
    %v330 = vadd.f32 %v256, %v329
    %v331 = vpop.f32.mrb[0].mxu0
    %332 = vmatprep.mubr.f32.mxu0 0.0
    %333 = vmatmul.mubr.f32.gmra.mrb[0].mxu0 %v261
    %v334 = vpop.f32.mrb[0].mxu0
    %v335 = vadd.f32 %v256, %v334
    %v336 = vpop.f32.mrb[0].mxu0
    %337 = vdwg.mxu0
    %v338 = vmax.f32 %v330, 0.0
    %v339 = vmax.f32 %v335, 0.0
    %v340 = vld [vmem:[#allocation5 + $0x80] sm:$0xff]
    %v341 = vld [vmem:[#allocation5 + $0x88] sm:$0xff]
    %v342 = vld [vmem:[#allocation5 + $0x90] sm:$0xff]
    %v343 = vld [vmem:[#allocation5 + $0x98] sm:$0xff]
    %v344 = vld [vmem:[#allocation5 + $0xa0] sm:$0xff]
    %v345 = vld [vmem:[#allocation5 + $0xa8] sm:$0xff]
    %v346 = vld [vmem:[#allocation5 + $0xb0] sm:$0xff]
    %v347 = vld [vmem:[#allocation5 + $0xb8] sm:$0xff]
    %v348 = vld [vmem:[#allocation7 + $0x3] sm:$0x1]
    %v349 = vlaneseq
    %v350 = vshrl.u32 %v349, 7
    %v351 = vsub.s32 0, %v350
    %v352 = vrot.slane %v348, %v351
    %v354 = vsel %vm164, %v338, 0
    %v357 = vsel %vm164, %v339, 0
    %359 = vmatprep.subr.mxu0 0.0
    %360 = vmatpush1.msra.mxu0 %v340
    %361 = vmatprep.subr.mxu0 0.0
    %362 = vmatpush1.msra.mxu0 %v341
    %363 = vmatprep.subr.mxu0 0.0
    %364 = vmatpush1.msra.mxu0 %v342
    %365 = vmatprep.subr.mxu0 0.0
    %366 = vmatpush1.msra.mxu0 %v343
    %367 = vmatprep.subr.mxu0 0.0
    %368 = vmatpush1.msra.mxu0 %v344
    %369 = vmatprep.subr.mxu0 0.0
    %370 = vmatpush1.msra.mxu0 %v345
    %371 = vmatprep.subr.mxu0 0.0
    %372 = vmatpush1.msra.mxu0 %v346
    %373 = vmatprep.subr.mxu0 0.0
    %374 = vmatpush1.msra.mxu0 %v347
    %375 = vmatprep.subr.mxu0 0.0
    %376 = vmatpush1.msra.mxu0 0.0
    %377 = vmatprep.subr.mxu0 0.0
    %378 = vmatpush1.msra.mxu0 0.0
    %379 = vmatprep.subr.mxu0 0.0
    %380 = vmatpush1.msra.mxu0 0.0
    %381 = vmatprep.subr.mxu0 0.0
    %382 = vmatpush1.msra.mxu0 0.0
    %383 = vmatprep.subr.mxu0 0.0
    %384 = vmatpush1.msra.mxu0 0.0
    %385 = vmatprep.subr.mxu0 0.0
    %386 = vmatpush1.msra.mxu0 0.0
    %387 = vmatprep.subr.mxu0 0.0
    %388 = vmatpush1.msra.mxu0 0.0
    %389 = vmatprep.subr.mxu0 0.0
    %390 = vmatpush1.msra.mxu0 0.0
    %391 = vmatprep.subr.mxu0 0.0
    %392 = vmatpush1.msra.mxu0 0.0
    %393 = vmatprep.subr.mxu0 0.0
    %394 = vmatpush1.msra.mxu0 0.0
    %395 = vmatprep.subr.mxu0 0.0
    %396 = vmatpush1.msra.mxu0 0.0
    %397 = vmatprep.subr.mxu0 0.0
    %398 = vmatpush1.msra.mxu0 0.0
    %399 = vmatprep.subr.mxu0 0.0
    %400 = vmatpush1.msra.mxu0 0.0
    %401 = vmatprep.subr.mxu0 0.0
    %402 = vmatpush1.msra.mxu0 0.0
    %403 = vmatprep.subr.mxu0 0.0
    %404 = vmatpush1.msra.mxu0 0.0
    %405 = vmatprep.subr.mxu0 0.0
    %406 = vmatpush1.msra.mxu0 0.0
    %407 = vmatprep.subr.mxu0 0.0
    %408 = vmatpush1.msra.mxu0 0.0
    %409 = vmatprep.subr.mxu0 0.0
    %410 = vmatpush1.msra.mxu0 0.0
    %411 = vmatprep.subr.mxu0 0.0
    %412 = vmatpush1.msra.mxu0 0.0
    %413 = vmatprep.subr.mxu0 0.0
    %414 = vmatpush1.msra.mxu0 0.0
    %415 = vmatprep.subr.mxu0 0.0
    %416 = vmatpush1.msra.mxu0 0.0
    %417 = vmatprep.subr.mxu0 0.0
    %418 = vmatpush1.msra.mxu0 0.0
    %419 = vmatprep.subr.mxu0 0.0
    %420 = vmatpush1.msra.mxu0 0.0
    %421 = vmatprep.subr.mxu0 0.0
    %422 = vmatpush1.msra.mxu0 0.0
    %423 = vmatprep.mubr.f32.mxu0 0.0
    %424 = vmatmul.mubr.f32.gmra.mrb[0].mxu0 %v354
    %v425 = vpop.f32.mrb[0].mxu0
    %v426 = vadd.f32 %v352, %v425
    %v427 = vpop.f32.mrb[0].mxu0
    %428 = vmatprep.mubr.f32.mxu0 0.0
    %429 = vmatmul.mubr.f32.gmra.mrb[0].mxu0 %v357
    %v430 = vpop.f32.mrb[0].mxu0
    %v431 = vadd.f32 %v352, %v430
    %v432 = vpop.f32.mrb[0].mxu0
    %433 = vdwg.mxu0
    %v434 = vmax.f32 %v426, 0.0
    %v435 = vmax.f32 %v431, 0.0
    %v436 = vld [vmem:[#allocation5 + $0xc0] sm:$0xff]
    %v437 = vld [vmem:[#allocation5 + $0xc8] sm:$0xff]
    %v438 = vld [vmem:[#allocation5 + $0xd0] sm:$0xff]
    %v439 = vld [vmem:[#allocation5 + $0xd8] sm:$0xff]
    %v440 = vld [vmem:[#allocation5 + $0xe0] sm:$0xff]
    %v441 = vld [vmem:[#allocation5 + $0xe8] sm:$0xff]
    %v442 = vld [vmem:[#allocation5 + $0xf0] sm:$0xff]
    %v443 = vld [vmem:[#allocation5 + $0xf8] sm:$0xff]
    %v444 = vld [vmem:[#allocation7 + $0x4] sm:$0x1]
    %v445 = vlaneseq
    %v446 = vshrl.u32 %v445, 7
    %v447 = vsub.s32 0, %v446
    %v448 = vrot.slane %v444, %v447
    %v450 = vsel %vm164, %v434, 0
    %v453 = vsel %vm164, %v435, 0
    %455 = vmatprep.subr.mxu0 0.0
    %456 = vmatpush1.msra.mxu0 %v436
    %457 = vmatprep.subr.mxu0 0.0
    %458 = vmatpush1.msra.mxu0 %v437
    %459 = vmatprep.subr.mxu0 0.0
    %460 = vmatpush1.msra.mxu0 %v438
    %461 = vmatprep.subr.mxu0 0.0
    %462 = vmatpush1.msra.mxu0 %v439
    %463 = vmatprep.subr.mxu0 0.0
    %464 = vmatpush1.msra.mxu0 %v440
    %465 = vmatprep.subr.mxu0 0.0
    %466 = vmatpush1.msra.mxu0 %v441
    %467 = vmatprep.subr.mxu0 0.0
    %468 = vmatpush1.msra.mxu0 %v442
    %469 = vmatprep.subr.mxu0 0.0
    %470 = vmatpush1.msra.mxu0 %v443
    %471 = vmatprep.subr.mxu0 0.0
    %472 = vmatpush1.msra.mxu0 0.0
    %473 = vmatprep.subr.mxu0 0.0
    %474 = vmatpush1.msra.mxu0 0.0
    %475 = vmatprep.subr.mxu0 0.0
    %476 = vmatpush1.msra.mxu0 0.0
    %477 = vmatprep.subr.mxu0 0.0
    %478 = vmatpush1.msra.mxu0 0.0
    %479 = vmatprep.subr.mxu0 0.0
    %480 = vmatpush1.msra.mxu0 0.0
    %481 = vmatprep.subr.mxu0 0.0
    %482 = vmatpush1.msra.mxu0 0.0
    %483 = vmatprep.subr.mxu0 0.0
    %484 = vmatpush1.msra.mxu0 0.0
    %485 = vmatprep.subr.mxu0 0.0
    %486 = vmatpush1.msra.mxu0 0.0
    %487 = vmatprep.subr.mxu0 0.0
    %488 = vmatpush1.msra.mxu0 0.0
    %489 = vmatprep.subr.mxu0 0.0
    %490 = vmatpush1.msra.mxu0 0.0
    %491 = vmatprep.subr.mxu0 0.0
    %492 = vmatpush1.msra.mxu0 0.0
    %493 = vmatprep.subr.mxu0 0.0
    %494 = vmatpush1.msra.mxu0 0.0
    %495 = vmatprep.subr.mxu0 0.0
    %496 = vmatpush1.msra.mxu0 0.0
    %497 = vmatprep.subr.mxu0 0.0
    %498 = vmatpush1.msra.mxu0 0.0
    %499 = vmatprep.subr.mxu0 0.0
    %500 = vmatpush1.msra.mxu0 0.0
    %501 = vmatprep.subr.mxu0 0.0
    %502 = vmatpush1.msra.mxu0 0.0
    %503 = vmatprep.subr.mxu0 0.0
    %504 = vmatpush1.msra.mxu0 0.0
    %505 = vmatprep.subr.mxu0 0.0
    %506 = vmatpush1.msra.mxu0 0.0
    %507 = vmatprep.subr.mxu0 0.0
    %508 = vmatpush1.msra.mxu0 0.0
    %509 = vmatprep.subr.mxu0 0.0
    %510 = vmatpush1.msra.mxu0 0.0
    %511 = vmatprep.subr.mxu0 0.0
    %512 = vmatpush1.msra.mxu0 0.0
    %513 = vmatprep.subr.mxu0 0.0
    %514 = vmatpush1.msra.mxu0 0.0
    %515 = vmatprep.subr.mxu0 0.0
    %516 = vmatpush1.msra.mxu0 0.0
    %517 = vmatprep.subr.mxu0 0.0
    %518 = vmatpush1.msra.mxu0 0.0
    %519 = vmatprep.mubr.f32.mxu0 0.0
    %520 = vmatmul.mubr.f32.gmra.mrb[0].mxu0 %v450
    %v521 = vpop.f32.mrb[0].mxu0
    %v522 = vadd.f32 %v448, %v521
    %v523 = vpop.f32.mrb[0].mxu0
    %524 = vmatprep.mubr.f32.mxu0 0.0
    %525 = vmatmul.mubr.f32.gmra.mrb[0].mxu0 %v453
    %v526 = vpop.f32.mrb[0].mxu0
    %v527 = vadd.f32 %v448, %v526
    %v528 = vpop.f32.mrb[0].mxu0
    %529 = vdwg.mxu0
    %v530 = vmax.f32 %v522, 0.0
    %v531 = vmax.f32 %v527, 0.0
    %v532 = vld [vmem:[#allocation5 + $0x100] sm:$0xff]
    %v533 = vld [vmem:[#allocation5 + $0x108] sm:$0xff]
    %v534 = vld [vmem:[#allocation5 + $0x110] sm:$0xff]
    %v535 = vld [vmem:[#allocation5 + $0x118] sm:$0xff]
    %v536 = vld [vmem:[#allocation7 + $0x5] sm:$0x1]
    %v537 = vlaneseq
    %v538 = vshrl.u32 %v537, 7
    %v539 = vsub.s32 0, %v538
    %v540 = vrot.slane %v536, %v539
    %v542 = vsel %vm67, %v530, 0
    %v545 = vsel %vm67, %v531, 0
    %547 = vmatprep.subr.mxu0 0.0
    %548 = vmatpush1.msra.mxu0 %v532
    %549 = vmatprep.subr.mxu0 0.0
    %550 = vmatpush1.msra.mxu0 %v533
    %551 = vmatprep.subr.mxu0 0.0
    %552 = vmatpush1.msra.mxu0 %v534
    %553 = vmatprep.subr.mxu0 0.0
    %554 = vmatpush1.msra.mxu0 %v535
    %555 = vmatprep.subr.mxu0 0.0
    %556 = vmatpush1.msra.mxu0 0.0
    %557 = vmatprep.subr.mxu0 0.0
    %558 = vmatpush1.msra.mxu0 0.0
    %559 = vmatprep.subr.mxu0 0.0
    %560 = vmatpush1.msra.mxu0 0.0
    %561 = vmatprep.subr.mxu0 0.0
    %562 = vmatpush1.msra.mxu0 0.0
    %563 = vmatprep.subr.mxu0 0.0
    %564 = vmatpush1.msra.mxu0 0.0
    %565 = vmatprep.subr.mxu0 0.0
    %566 = vmatpush1.msra.mxu0 0.0
    %567 = vmatprep.subr.mxu0 0.0
    %568 = vmatpush1.msra.mxu0 0.0
    %569 = vmatprep.subr.mxu0 0.0
    %570 = vmatpush1.msra.mxu0 0.0
    %571 = vmatprep.subr.mxu0 0.0
    %572 = vmatpush1.msra.mxu0 0.0
    %573 = vmatprep.subr.mxu0 0.0
    %574 = vmatpush1.msra.mxu0 0.0
    %575 = vmatprep.subr.mxu0 0.0
    %576 = vmatpush1.msra.mxu0 0.0
    %577 = vmatprep.subr.mxu0 0.0
    %578 = vmatpush1.msra.mxu0 0.0
    %579 = vmatprep.subr.mxu0 0.0
    %580 = vmatpush1.msra.mxu0 0.0
    %581 = vmatprep.subr.mxu0 0.0
    %582 = vmatpush1.msra.mxu0 0.0
    %583 = vmatprep.subr.mxu0 0.0
    %584 = vmatpush1.msra.mxu0 0.0
    %585 = vmatprep.subr.mxu0 0.0
    %586 = vmatpush1.msra.mxu0 0.0
    %587 = vmatprep.subr.mxu0 0.0
    %588 = vmatpush1.msra.mxu0 0.0
    %589 = vmatprep.subr.mxu0 0.0
    %590 = vmatpush1.msra.mxu0 0.0
    %591 = vmatprep.subr.mxu0 0.0
    %592 = vmatpush1.msra.mxu0 0.0
    %593 = vmatprep.subr.mxu0 0.0
    %594 = vmatpush1.msra.mxu0 0.0
    %595 = vmatprep.subr.mxu0 0.0
    %596 = vmatpush1.msra.mxu0 0.0
    %597 = vmatprep.subr.mxu0 0.0
    %598 = vmatpush1.msra.mxu0 0.0
    %599 = vmatprep.subr.mxu0 0.0
    %600 = vmatpush1.msra.mxu0 0.0
    %601 = vmatprep.subr.mxu0 0.0
    %602 = vmatpush1.msra.mxu0 0.0
    %603 = vmatprep.subr.mxu0 0.0
    %604 = vmatpush1.msra.mxu0 0.0
    %605 = vmatprep.subr.mxu0 0.0
    %606 = vmatpush1.msra.mxu0 0.0
    %607 = vmatprep.subr.mxu0 0.0
    %608 = vmatpush1.msra.mxu0 0.0
    %609 = vmatprep.subr.mxu0 0.0
    %610 = vmatpush1.msra.mxu0 0.0
    %611 = vmatprep.mubr.f32.mxu0 0.0
    %612 = vmatmul.mubr.f32.gmra.mrb[0].mxu0 %v542
    %v613 = vpop.f32.mrb[0].mxu0
    %v614 = vadd.f32 %v540, %v613
    %v615 = vpop.f32.mrb[0].mxu0
    %616 = vmatprep.mubr.f32.mxu0 0.0
    %617 = vmatmul.mubr.f32.gmra.mrb[0].mxu0 %v545
    %v618 = vpop.f32.mrb[0].mxu0
    %v619 = vadd.f32 %v540, %v618
    %v620 = vpop.f32.mrb[0].mxu0
    %621 = vdwg.mxu0
    %v622 = vld [vmem:[#allocation5 + $0x120] sm:$0xff]
    %v623 = vld [vmem:[#allocation5 + $0x128] sm:$0xff]
    %v624 = vld [vmem:[#allocation5 + $0x130] sm:$0xff]
    %v625 = vld [vmem:[#allocation5 + $0x138] sm:$0xff]
    %v626 = vld [vmem:[#allocation7 + $0x6] sm:$0x1]
    %v627 = vlaneseq
    %v628 = vshrl.u32 %v627, 7
    %v629 = vsub.s32 0, %v628
    %v630 = vrot.slane %v626, %v629
    %631 = vrot.lane.b32.xlu0 %v246, 96
    %v632 = vpop.permute.xlu0 %631
    %633 = vrot.lane.b32.xlu0 %v247, 96
    %v634 = vpop.permute.xlu0 %633
    %v635 = vsel %vm67, %v632, 0
    %v637 = vsel %vm67, %v634, 0
    %639 = vmatprep.subr.mxu0 0.0
    %640 = vmatpush1.msra.mxu0 %v622
    %641 = vmatprep.subr.mxu0 0.0
    %642 = vmatpush1.msra.mxu0 %v623
    %643 = vmatprep.subr.mxu0 0.0
    %644 = vmatpush1.msra.mxu0 %v624
    %645 = vmatprep.subr.mxu0 0.0
    %646 = vmatpush1.msra.mxu0 %v625
    %647 = vmatprep.subr.mxu0 0.0
    %648 = vmatpush1.msra.mxu0 0.0
    %649 = vmatprep.subr.mxu0 0.0
    %650 = vmatpush1.msra.mxu0 0.0
    %651 = vmatprep.subr.mxu0 0.0
    %652 = vmatpush1.msra.mxu0 0.0
    %653 = vmatprep.subr.mxu0 0.0
    %654 = vmatpush1.msra.mxu0 0.0
    %655 = vmatprep.subr.mxu0 0.0
    %656 = vmatpush1.msra.mxu0 0.0
    %657 = vmatprep.subr.mxu0 0.0
    %658 = vmatpush1.msra.mxu0 0.0
    %659 = vmatprep.subr.mxu0 0.0
    %660 = vmatpush1.msra.mxu0 0.0
    %661 = vmatprep.subr.mxu0 0.0
    %662 = vmatpush1.msra.mxu0 0.0
    %663 = vmatprep.subr.mxu0 0.0
    %664 = vmatpush1.msra.mxu0 0.0
    %665 = vmatprep.subr.mxu0 0.0
    %666 = vmatpush1.msra.mxu0 0.0
    %667 = vmatprep.subr.mxu0 0.0
    %668 = vmatpush1.msra.mxu0 0.0
    %669 = vmatprep.subr.mxu0 0.0
    %670 = vmatpush1.msra.mxu0 0.0
    %671 = vmatprep.subr.mxu0 0.0
    %672 = vmatpush1.msra.mxu0 0.0
    %673 = vmatprep.subr.mxu0 0.0
    %674 = vmatpush1.msra.mxu0 0.0
    %675 = vmatprep.subr.mxu0 0.0
    %676 = vmatpush1.msra.mxu0 0.0
    %677 = vmatprep.subr.mxu0 0.0
    %678 = vmatpush1.msra.mxu0 0.0
    %679 = vmatprep.subr.mxu0 0.0
    %680 = vmatpush1.msra.mxu0 0.0
    %681 = vmatprep.subr.mxu0 0.0
    %682 = vmatpush1.msra.mxu0 0.0
    %683 = vmatprep.subr.mxu0 0.0
    %684 = vmatpush1.msra.mxu0 0.0
    %685 = vmatprep.subr.mxu0 0.0
    %686 = vmatpush1.msra.mxu0 0.0
    %687 = vmatprep.subr.mxu0 0.0
    %688 = vmatpush1.msra.mxu0 0.0
    %689 = vmatprep.subr.mxu0 0.0
    %690 = vmatpush1.msra.mxu0 0.0
    %691 = vmatprep.subr.mxu0 0.0
    %692 = vmatpush1.msra.mxu0 0.0
    %693 = vmatprep.subr.mxu0 0.0
    %694 = vmatpush1.msra.mxu0 0.0
    %695 = vmatprep.subr.mxu0 0.0
    %696 = vmatpush1.msra.mxu0 0.0
    %697 = vmatprep.subr.mxu0 0.0
    %698 = vmatpush1.msra.mxu0 0.0
    %699 = vmatprep.subr.mxu0 0.0
    %700 = vmatpush1.msra.mxu0 0.0
    %701 = vmatprep.subr.mxu0 0.0
    %702 = vmatpush1.msra.mxu0 0.0
    %703 = vmatprep.mubr.f32.mxu0 0.0
    %704 = vmatmul.mubr.f32.gmra.mrb[0].mxu0 %v635
    %v705 = vpop.f32.mrb[0].mxu0
    %v706 = vadd.f32 %v630, %v705
    %v707 = vpop.f32.mrb[0].mxu0
    %708 = vmatprep.mubr.f32.mxu0 0.0
    %709 = vmatmul.mubr.f32.gmra.mrb[0].mxu0 %v637
    %v710 = vpop.f32.mrb[0].mxu0
    %v711 = vadd.f32 %v630, %v710
    %v712 = vpop.f32.mrb[0].mxu0
    %713 = vdwg.mxu0
    %v714 = vmax.f32 %v706, 0.0
    %v715 = vmax.f32 %v711, 0.0
    %v716 = vld [vmem:[#allocation5 + $0x140] sm:$0xff]
    %v717 = vld [vmem:[#allocation5 + $0x148] sm:$0xff]
    %v718 = vld [vmem:[#allocation5 + $0x150] sm:$0xff]
    %v719 = vld [vmem:[#allocation5 + $0x158] sm:$0xff]
    %v720 = vld [vmem:[#allocation5 + $0x160] sm:$0xff]
    %v721 = vld [vmem:[#allocation5 + $0x168] sm:$0xff]
    %v722 = vld [vmem:[#allocation5 + $0x170] sm:$0xff]
    %v723 = vld [vmem:[#allocation5 + $0x178] sm:$0xff]
    %v724 = vld [vmem:[#allocation7 + $0x7] sm:$0x1]
    %v725 = vlaneseq
    %v726 = vshrl.u32 %v725, 7
    %v727 = vsub.s32 0, %v726
    %v728 = vrot.slane %v724, %v727
    %v730 = vsel %vm164, %v714, 0
    %v733 = vsel %vm164, %v715, 0
    %735 = vmatprep.subr.mxu0 0.0
    %736 = vmatpush1.msra.mxu0 %v716
    %737 = vmatprep.subr.mxu0 0.0
    %738 = vmatpush1.msra.mxu0 %v717
    %739 = vmatprep.subr.mxu0 0.0
    %740 = vmatpush1.msra.mxu0 %v718
    %741 = vmatprep.subr.mxu0 0.0
    %742 = vmatpush1.msra.mxu0 %v719
    %743 = vmatprep.subr.mxu0 0.0
    %744 = vmatpush1.msra.mxu0 %v720
    %745 = vmatprep.subr.mxu0 0.0
    %746 = vmatpush1.msra.mxu0 %v721
    %747 = vmatprep.subr.mxu0 0.0
    %748 = vmatpush1.msra.mxu0 %v722
    %749 = vmatprep.subr.mxu0 0.0
    %750 = vmatpush1.msra.mxu0 %v723
    %751 = vmatprep.subr.mxu0 0.0
    %752 = vmatpush1.msra.mxu0 0.0
    %753 = vmatprep.subr.mxu0 0.0
    %754 = vmatpush1.msra.mxu0 0.0
    %755 = vmatprep.subr.mxu0 0.0
    %756 = vmatpush1.msra.mxu0 0.0
    %757 = vmatprep.subr.mxu0 0.0
    %758 = vmatpush1.msra.mxu0 0.0
    %759 = vmatprep.subr.mxu0 0.0
    %760 = vmatpush1.msra.mxu0 0.0
    %761 = vmatprep.subr.mxu0 0.0
    %762 = vmatpush1.msra.mxu0 0.0
    %763 = vmatprep.subr.mxu0 0.0
    %764 = vmatpush1.msra.mxu0 0.0
    %765 = vmatprep.subr.mxu0 0.0
    %766 = vmatpush1.msra.mxu0 0.0
    %767 = vmatprep.subr.mxu0 0.0
    %768 = vmatpush1.msra.mxu0 0.0
    %769 = vmatprep.subr.mxu0 0.0
    %770 = vmatpush1.msra.mxu0 0.0
    %771 = vmatprep.subr.mxu0 0.0
    %772 = vmatpush1.msra.mxu0 0.0
    %773 = vmatprep.subr.mxu0 0.0
    %774 = vmatpush1.msra.mxu0 0.0
    %775 = vmatprep.subr.mxu0 0.0
    %776 = vmatpush1.msra.mxu0 0.0
    %777 = vmatprep.subr.mxu0 0.0
    %778 = vmatpush1.msra.mxu0 0.0
    %779 = vmatprep.subr.mxu0 0.0
    %780 = vmatpush1.msra.mxu0 0.0
    %781 = vmatprep.subr.mxu0 0.0
    %782 = vmatpush1.msra.mxu0 0.0
    %783 = vmatprep.subr.mxu0 0.0
    %784 = vmatpush1.msra.mxu0 0.0
    %785 = vmatprep.subr.mxu0 0.0
    %786 = vmatpush1.msra.mxu0 0.0
    %787 = vmatprep.subr.mxu0 0.0
    %788 = vmatpush1.msra.mxu0 0.0
    %789 = vmatprep.subr.mxu0 0.0
    %790 = vmatpush1.msra.mxu0 0.0
    %791 = vmatprep.subr.mxu0 0.0
    %792 = vmatpush1.msra.mxu0 0.0
    %793 = vmatprep.subr.mxu0 0.0
    %794 = vmatpush1.msra.mxu0 0.0
    %795 = vmatprep.subr.mxu0 0.0
    %796 = vmatpush1.msra.mxu0 0.0
    %797 = vmatprep.subr.mxu0 0.0
    %798 = vmatpush1.msra.mxu0 0.0
    %799 = vmatprep.mubr.f32.mxu0 0.0
    %800 = vmatmul.mubr.f32.gmra.mrb[0].mxu0 %v730
    %v801 = vpop.f32.mrb[0].mxu0
    %v802 = vadd.f32 %v728, %v801
    %v803 = vpop.f32.mrb[0].mxu0
    %804 = vmatprep.mubr.f32.mxu0 0.0
    %805 = vmatmul.mubr.f32.gmra.mrb[0].mxu0 %v733
    %v806 = vpop.f32.mrb[0].mxu0
    %v807 = vadd.f32 %v728, %v806
    %v808 = vpop.f32.mrb[0].mxu0
    %809 = vdwg.mxu0
    %v810 = vmax.f32 %v802, 0.0
    %v811 = vmax.f32 %v807, 0.0
    %v812 = vld [vmem:[#allocation5 + $0x180] sm:$0xff]
    %v813 = vld [vmem:[#allocation5 + $0x188] sm:$0xff]
    %v814 = vld [vmem:[#allocation5 + $0x190] sm:$0xff]
    %v815 = vld [vmem:[#allocation5 + $0x198] sm:$0xff]
    %v816 = vld [vmem:[#allocation5 + $0x1a0] sm:$0xff]
    %v817 = vld [vmem:[#allocation5 + $0x1a8] sm:$0xff]
    %v818 = vld [vmem:[#allocation5 + $0x1b0] sm:$0xff]
    %v819 = vld [vmem:[#allocation5 + $0x1b8] sm:$0xff]
    %v820 = vld [vmem:[#allocation7 + $0x8] sm:$0x1]
    %v821 = vlaneseq
    %v822 = vshrl.u32 %v821, 7
    %v823 = vsub.s32 0, %v822
    %v824 = vrot.slane %v820, %v823
    %v826 = vsel %vm164, %v810, 0
    %v829 = vsel %vm164, %v811, 0
    %831 = vmatprep.subr.mxu0 0.0
    %832 = vmatpush1.msra.mxu0 %v812
    %833 = vmatprep.subr.mxu0 0.0
    %834 = vmatpush1.msra.mxu0 %v813
    %835 = vmatprep.subr.mxu0 0.0
    %836 = vmatpush1.msra.mxu0 %v814
    %837 = vmatprep.subr.mxu0 0.0
    %838 = vmatpush1.msra.mxu0 %v815
    %839 = vmatprep.subr.mxu0 0.0
    %840 = vmatpush1.msra.mxu0 %v816
    %841 = vmatprep.subr.mxu0 0.0
    %842 = vmatpush1.msra.mxu0 %v817
    %843 = vmatprep.subr.mxu0 0.0
    %844 = vmatpush1.msra.mxu0 %v818
    %845 = vmatprep.subr.mxu0 0.0
    %846 = vmatpush1.msra.mxu0 %v819
    %847 = vmatprep.subr.mxu0 0.0
    %848 = vmatpush1.msra.mxu0 0.0
    %849 = vmatprep.subr.mxu0 0.0
    %850 = vmatpush1.msra.mxu0 0.0
    %851 = vmatprep.subr.mxu0 0.0
    %852 = vmatpush1.msra.mxu0 0.0
    %853 = vmatprep.subr.mxu0 0.0
    %854 = vmatpush1.msra.mxu0 0.0
    %855 = vmatprep.subr.mxu0 0.0
    %856 = vmatpush1.msra.mxu0 0.0
    %857 = vmatprep.subr.mxu0 0.0
    %858 = vmatpush1.msra.mxu0 0.0
    %859 = vmatprep.subr.mxu0 0.0
    %860 = vmatpush1.msra.mxu0 0.0
    %861 = vmatprep.subr.mxu0 0.0
    %862 = vmatpush1.msra.mxu0 0.0
    %863 = vmatprep.subr.mxu0 0.0
    %864 = vmatpush1.msra.mxu0 0.0
    %865 = vmatprep.subr.mxu0 0.0
    %866 = vmatpush1.msra.mxu0 0.0
    %867 = vmatprep.subr.mxu0 0.0
    %868 = vmatpush1.msra.mxu0 0.0
    %869 = vmatprep.subr.mxu0 0.0
    %870 = vmatpush1.msra.mxu0 0.0
    %871 = vmatprep.subr.mxu0 0.0
    %872 = vmatpush1.msra.mxu0 0.0
    %873 = vmatprep.subr.mxu0 0.0
    %874 = vmatpush1.msra.mxu0 0.0
    %875 = vmatprep.subr.mxu0 0.0
    %876 = vmatpush1.msra.mxu0 0.0
    %877 = vmatprep.subr.mxu0 0.0
    %878 = vmatpush1.msra.mxu0 0.0
    %879 = vmatprep.subr.mxu0 0.0
    %880 = vmatpush1.msra.mxu0 0.0
    %881 = vmatprep.subr.mxu0 0.0
    %882 = vmatpush1.msra.mxu0 0.0
    %883 = vmatprep.subr.mxu0 0.0
    %884 = vmatpush1.msra.mxu0 0.0
    %885 = vmatprep.subr.mxu0 0.0
    %886 = vmatpush1.msra.mxu0 0.0
    %887 = vmatprep.subr.mxu0 0.0
    %888 = vmatpush1.msra.mxu0 0.0
    %889 = vmatprep.subr.mxu0 0.0
    %890 = vmatpush1.msra.mxu0 0.0
    %891 = vmatprep.subr.mxu0 0.0
    %892 = vmatpush1.msra.mxu0 0.0
    %893 = vmatprep.subr.mxu0 0.0
    %894 = vmatpush1.msra.mxu0 0.0
    %895 = vmatprep.mubr.f32.mxu0 0.0
    %896 = vmatmul.mubr.f32.gmra.mrb[0].mxu0 %v826
    %v897 = vpop.f32.mrb[0].mxu0
    %v898 = vadd.f32 %v824, %v897
    %v899 = vpop.f32.mrb[0].mxu0
    %900 = vmatprep.mubr.f32.mxu0 0.0
    %901 = vmatmul.mubr.f32.gmra.mrb[0].mxu0 %v829
    %v902 = vpop.f32.mrb[0].mxu0
    %v903 = vadd.f32 %v824, %v902
    %v904 = vpop.f32.mrb[0].mxu0
    %905 = vdwg.mxu0
    %908 = vrot.lane.b32.xlu0 %v898, 112
    %v909 = vpop.permute.xlu0 %908
    %910 = vrot.lane.b32.xlu0 %v903, 112
    %v911 = vpop.permute.xlu0 %910
    %v914 = vsub.f32 %v898, %v909
    %v915 = vsub.f32 %v903, %v911
    %v916 = vmul.f32 %v914, %v914
    %v917 = vmul.f32 %v915, %v915
    %vm918 = vcmask 130048
    %v919 = vsel %vm918, %v916, 0.0
    %920 = vadd.xlane.f32.xlu0 %v919
    %v921 = vpop.xlane.xlu0 %920
    %v922 = vsel %vm918, %v917, 0.0
    %923 = vadd.xlane.f32.xlu0 %v922
    %v924 = vpop.xlane.xlu0 %923
    %v925 = vrcp.pop 16.0
    %v926 = vmul.f32 %v921, %v925
    %v927 = vmul.f32 %v924, %v925
    %v928 = vlaneseq
    %v929 = vand.u32 %v928, 127
    %vm930 = vcmp.eq.s32.totalorder %v929, 2
    %v931 = vsel %vm930, 1, 0
    %v932 = vcvt.s32.f32 %v931
    %v933 = vmul.f32 %v926, %v932
    %v934 = vmul.f32 %v927, %v932
    %v935 = vadd.f32 %v614, %v933
    %v936 = vadd.f32 %v619, %v934
    %937 = vst [vmem:[#allocation8] sm:$0xff] %v935
    %938 = vst [vmem:[#allocation8 + $0x8] sm:$0xff] %v936
    // Predicated region
    $region26: #{tpu_custom_call.1} parent=1 // pred_check
      _
    $region27: #{tpu_custom_call.1} parent=1 // pred_check_branch
      %940 = sbr.rel (0) target = $region29
    $region28: #{tpu_custom_call.1} parent=1 // pred_region
      %s942 = ssub.s32 256, 256
      %943 = vsyncadd [#allocation4], %s942
      %s944 = sshll.u32 [#allocation8], 4
      %s945 = int_to_ptr.vmem [resolvable:$true] %s944
      %950 = dma.vmem_to_hbm [thread:$0]  %s945, 256, %s3, [#allocation4], 128, 128, 8
    $region29: #{tpu_custom_call.1} parent=1 // pred_fallthru
      _
    // Predicated region
    $region30: #{tpu_custom_call.1} parent=1 // pred_check
      _
    $region31: #{tpu_custom_call.1} parent=1 // pred_check_branch
      %952 = sbr.rel (0) target = $region33
    $region32: #{tpu_custom_call.1} parent=1 // pred_region
      %953 = dma.done [#allocation4], 256
    $region33: #{tpu_custom_call.1} parent=1 // pred_fallthru
      _
    %954 = vsyncpa [#allocation3], 1
    %955 = vsyncpa [#allocation6], 1
    %956 = vsyncpa [#allocation4], 1

</llo_original>
